<compile_context>
chip_gen: v7x
topology: tpu7x:2x2x1
jax: 0.10.0
libtpu: 0.0.40
codegen_flags: <defaults>
</compile_context>

<pallas_src>
import jax
import jax.numpy as jnp
from jax.experimental import pallas as pl
from jax.experimental.pallas import tpu as pltpu


_TARGET_OUT_BLOCK_BYTES = 2 << 20    # ~2 MiB output block per grid step
_VMEM_LIVE_BUDGET_BYTES = 16 << 20   # 2 buffers x (in_a + in_b + out) blocks
_VMEM_LIMIT_BYTES = 32 * 1024 * 1024  # safe on v5e/v6e (128 MiB) and v7x (64 MiB)
_SMALL_TOTAL_BYTES = 2 << 20         # below this, plain jnp.concatenate wins
_MIN_GRID_STEPS = 8


def _round_up(x: int, m: int) -> int:
    return ((x + m - 1) // m) * m


def _sublane_pack(dtype) -> int:
    # f32 -> 8, bf16/f16 -> 16, int8/fp8 -> 32 (sub-32-bit packs along sublanes).
    return max(8, 32 // jnp.dtype(dtype).itemsize)


def _cat_two_store_kernel(a_ref, b_ref, o_ref):
    # Generic case: o_ref is the full, lane-dense (tr, d1 + d2) block.
    d1 = a_ref.shape[-1]
    o_ref[:, :d1] = a_ref[...]
    o_ref[:, d1:] = b_ref[...]


def _cat_split_kernel(a_ref, b_ref, o_ref):
    # d1 == d2 and 128-aligned: each grid step writes one full (tr, d) block,
    # so every output store is a lane-aligned, unmasked slab.
    j = pl.program_id(1)

    @pl.when(j == 0)
    def _():
        o_ref[...] = a_ref[...]

    @pl.when(j == 1)
    def _():
        o_ref[...] = b_ref[...]


def _row_tile(rows: int, dout: int, itemsize: int, pack: int) -> int:
    tr_budget = _TARGET_OUT_BLOCK_BYTES // (dout * itemsize)
    tr_vmem = _VMEM_LIVE_BUDGET_BYTES // (4 * dout * itemsize)
    # Keep >= ~8 grid steps so both v7x TensorCores and the pipeline stay busy.
    tr_steps = _round_up(max(1, -(-rows // _MIN_GRID_STEPS)), pack)
    tr = min(tr_budget, tr_vmem, tr_steps)
    tr = max(pack, (tr // pack) * pack)
    if rows <= pack:
        tr = rows  # block dim equal to full array dim is always legal
    return tr


def cat_last_dim(a: jax.Array, b: jax.Array, *, force_pallas: bool = False) -> jax.Array:
    """Concatenate a and b along the last axis (Pallas TPU for large inputs)."""
    assert a.shape[:-1] == b.shape[:-1], "leading dims must match"
    assert a.dtype == b.dtype, "dtypes must match"

    lead = a.shape[:-1]
    d1, d2 = a.shape[-1], b.shape[-1]
    dout = d1 + d2
    rows = 1
    for s in lead:
        rows *= s

    itemsize = jnp.dtype(a.dtype).itemsize
    pack = _sublane_pack(a.dtype)
    total_bytes = rows * dout * itemsize

    degenerate = (rows == 0) or (d1 == 0) or (d2 == 0)
    small = (total_bytes < _SMALL_TOTAL_BYTES) or (rows < pack)
    if degenerate or (small and not force_pallas):
        # Tiny / degenerate tensors: XLA fuses the concat for free; a
        # pallas_call launch would cost more than the copy itself.
        return jnp.concatenate([a, b], axis=-1)

    a2 = a.reshape(rows, d1)
    b2 = b.reshape(rows, d2)

    tr = _row_tile(rows, dout, itemsize, pack)
    rows_padded = _round_up(rows, tr)
    if rows_padded != rows:
        # Wrapper-side row padding keeps tiling/double-buffering for odd shapes.
        a2 = jnp.pad(a2, ((0, rows_padded - rows), (0, 0)))
        b2 = jnp.pad(b2, ((0, rows_padded - rows), (0, 0)))
    n_row_tiles = rows_padded // tr

    lane_dense_split = (d1 == d2) and (d1 % 128 == 0)

    if lane_dense_split:
        out2 = pl.pallas_call(
            _cat_split_kernel,
            out_shape=jax.ShapeDtypeStruct((rows_padded, dout), a.dtype),
            grid_spec=pltpu.PrefetchScalarGridSpec(
                num_scalar_prefetch=0,
                grid=(n_row_tiles, 2),
                in_specs=[
                    pl.BlockSpec((tr, d1), lambda i, j: (i, 0)),
                    pl.BlockSpec((tr, d2), lambda i, j: (i, 0)),
                ],
                out_specs=pl.BlockSpec((tr, d1), lambda i, j: (i, j)),
            ),
            compiler_params=pltpu.CompilerParams(
                dimension_semantics=("parallel", "arbitrary"),
                vmem_limit_bytes=_VMEM_LIMIT_BYTES,
            ),
        )(a2, b2)
    else:
        out2 = pl.pallas_call(
            _cat_two_store_kernel,
            out_shape=jax.ShapeDtypeStruct((rows_padded, dout), a.dtype),
            grid_spec=pltpu.PrefetchScalarGridSpec(
                num_scalar_prefetch=0,
                grid=(n_row_tiles,),
                in_specs=[
                    pl.BlockSpec((tr, d1), lambda i: (i, 0)),
                    pl.BlockSpec((tr, d2), lambda i: (i, 0)),
                ],
                out_specs=pl.BlockSpec((tr, dout), lambda i: (i, 0)),
            ),
            compiler_params=pltpu.CompilerParams(
                dimension_semantics=("parallel",),
                vmem_limit_bytes=_VMEM_LIMIT_BYTES,
            ),
        )(a2, b2)

    if rows_padded != rows:
        out2 = out2[:rows]
    return out2.reshape(*lead, dout)


class CatLayer:
    """JAX/Pallas equivalent of the PyTorch CatLayer module (no parameters)."""

    def __init__(self, force_pallas: bool = False):
        self.force_pallas = force_pallas

    def __call__(self, x):
        return cat_last_dim(x[0], x[1], force_pallas=self.force_pallas)


if __name__ == "__main__":
    key = jax.random.PRNGKey(0)
    k0, k1, k2, k3, k4, k5 = jax.random.split(key, 6)

    # 1) Module-sized NCHW test; force_pallas exercises the generic two-store
    #    kernel (rows = 128, tr = 16, grid = 8).
    x0 = jax.random.normal(k0, (2, 4, 16, 16), dtype=jnp.float32)
    x1 = jax.random.normal(k1, (2, 4, 16, 16), dtype=jnp.float32)
    layer = CatLayer(force_pallas=True)
    out = jax.block_until_ready(layer((x0, x1)))
    ref = jnp.concatenate([x0, x1], axis=-1)
    assert out.shape == (2, 4, 16, 32), out.shape
    assert jnp.array_equal(out, ref), "mismatch vs jnp.concatenate (test 1)"

    # 2) Unequal last dims + rows (60) not a multiple of the sublane pack:
    #    exercises wrapper-side row padding.
    y0 = jax.random.normal(k2, (2, 3, 10, 24), dtype=jnp.float32)
    y1 = jax.random.normal(k3, (2, 3, 10, 40), dtype=jnp.float32)
    out2 = jax.block_until_ready(cat_last_dim(y0, y1, force_pallas=True))
    assert jnp.array_equal(out2, jnp.concatenate([y0, y1], axis=-1)), "test 2"

    # 3) 128-aligned equal halves: exercises the lane-dense split kernel.
    z0 = jax.random.normal(k4, (2, 2, 8, 128), dtype=jnp.float32)
    z1 = jax.random.normal(k5, (2, 2, 8, 128), dtype=jnp.float32)
    out3 = jax.block_until_ready(cat_last_dim(z0, z1, force_pallas=True))
    assert jnp.array_equal(out3, jnp.concatenate([z0, z1], axis=-1)), "test 3"

    # 4) bf16: dtype-aware sublane multiple (tr % 16 == 0).
    w0 = x0.astype(jnp.bfloat16)
    w1 = x1.astype(jnp.bfloat16)
    out4 = jax.block_until_ready(cat_last_dim(w0, w1, force_pallas=True))
    assert jnp.array_equal(out4, jnp.concatenate([w0, w1], axis=-1)), "test 4"

    # 5) Default dispatcher: tiny inputs take the jnp.concatenate fast path.
    out5 = jax.block_until_ready(CatLayer()((x0, x1)))
    assert jnp.array_equal(out5, ref), "test 5"

    print("KERNEL_OK")
</pallas_src>

<mosaic_0001>
module attributes {stable_mosaic.version = 11 : i64} {
  func.func @_cat_two_store_kernel(%arg0: i32, %arg1: memref<16x16xf32, #tpu.memory_space<vmem>>, %arg2: memref<16x16xf32, #tpu.memory_space<vmem>>, %arg3: memref<16x32xf32, #tpu.memory_space<vmem>>) attributes {dimension_semantics = [#tpu.dimension_semantics<parallel>], iteration_bounds = array<i64: 8>, scalar_prefetch = 0 : i64, scratch_operands = 0 : i64, tpu.core_type = #tpu.core_type<tc>, window_params = [{transform_indices = @transform_0, window_bounds = array<i64: 16, 16>}, {transform_indices = @transform_1, window_bounds = array<i64: 16, 16>}, {transform_indices = @transform_2, window_bounds = array<i64: 16, 32>}]} {
    %c0 = arith.constant 0 : index
    %c0_0 = arith.constant 0 : index
    %0 = vector.load %arg1[%c0, %c0_0] : memref<16x16xf32, #tpu.memory_space<vmem>>, vector<16x16xf32>
    %c0_1 = arith.constant 0 : index
    %c0_2 = arith.constant 0 : index
    %1 = vector.load %arg3[%c0_1, %c0_2] : memref<16x32xf32, #tpu.memory_space<vmem>>, vector<16x16xf32>
    tpu.vector_store %arg3[%c0_1, %c0_2], %0 {strides = array<i32>} : memref<16x32xf32, #tpu.memory_space<vmem>>, vector<16x16xf32>,
    %c0_3 = arith.constant 0 : index
    %c0_4 = arith.constant 0 : index
    %2 = vector.load %arg2[%c0_3, %c0_4] : memref<16x16xf32, #tpu.memory_space<vmem>>, vector<16x16xf32>
    %c0_5 = arith.constant 0 : index
    %c16 = arith.constant 16 : index
    %3 = vector.load %arg3[%c0_5, %c16] : memref<16x32xf32, #tpu.memory_space<vmem>>, vector<16x16xf32>
    tpu.vector_store %arg3[%c0_5, %c16], %2 {strides = array<i32>} : memref<16x32xf32, #tpu.memory_space<vmem>>, vector<16x16xf32>,
    return
  }
  func.func @transform_0(%arg0: i32) -> (i32, i32) {
    %c0_i32 = arith.constant 0 : i32
    %c0_i32_0 = arith.constant 0 : i32
    return %arg0, %c0_i32 : i32, i32
  }
  func.func @transform_1(%arg0: i32) -> (i32, i32) {
    %c0_i32 = arith.constant 0 : i32
    %c0_i32_0 = arith.constant 0 : i32
    return %arg0, %c0_i32 : i32, i32
  }
  func.func @transform_2(%arg0: i32) -> (i32, i32) {
    %c0_i32 = arith.constant 0 : i32
    %c0_i32_0 = arith.constant 0 : i32
    return %arg0, %c0_i32 : i32, i32
  }
}

</mosaic_0001>

<llo_original>
// kernel: tpu_custom_call.1
$region0: #{tpu_custom_call.1}
  #allocation0 [shape = 'u32[]', space=smem, size = 0x4, offset = 0x4, fixed_abs, tag = 'smem constant byte address 0x4 - core index']
  #allocation1 [shape = 'u32[144,128]{1,0:T(1,128)}', space=vmem, size = 0x12000, scoped, tag = 'internal scratch']
  %s0 = inlined_call_operand.vmem [shape: f32[128,16], index: 0, kind: input, shape index: {}]
  %s1 = inlined_call_operand.vmem [shape: f32[128,16], index: 1, kind: input, shape index: {}]
  %s2 = inlined_call_operand.vmem [shape: f32[128,32], index: 2, kind: output, shape index: {}]
  %s3 = sld [smem:[#allocation0]]
  $region41: #{tpu_custom_call.1} parent=0
    _
  %s5 = ssub.s32 1, %s3
  %s6 = scalar_select 0, %s5, %s3
  loop: start=0, step=1, limit=10
  $region2: #{tpu_custom_call.1} parent=0 // loop_pre_header
    _
  $region3: #{tpu_custom_call.1} parent=0 // loop_header
    %s8 = sphi 0, %s12
    %p9 = scmp.ge.s32.totalorder %s8, 10
    %s18 = sphi 0, %s20
    %s21 = sphi 0, %s18
    %s22 = sphi 0, %s21
    %s38 = sphi 0, %s22
    %s44 = sphi 0, %s46
    %s47 = sphi 0, %s44
    %s48 = sphi 0, %s47
    %s64 = sphi 0, %s48
    %s70 = sphi 0, %s72
    %s73 = sphi 0, %s70
    %s74 = sphi 0, %s73
    %s90 = sphi 0, %s74
  $region4: #{tpu_custom_call.1} parent=0 // loop_header_branch
    %11 = sbr.rel (%p9) target = $region8
  $region5: #{tpu_custom_call.1} parent=0 // loop_body
    %s13 = ssub.s32 %s8, 1
    %s14 = ssub.s32 %s8, 2
    %s15 = sadd.s32 %s8, 1
    %s16 = ssub.s32 %s8, %s15
    %p17 = scmp.eq.s32.totalorder %s16, 0
    %s19 = sadd.s32 %s18, 1
    %s20 = scalar_select %p17, %s18, %s19
    %p23 = pneg %p17
    %p24 = scmp.eq.s32.totalorder %s8, 7
    %p25 = por %p23, %p24
    %p26 = scmp.ne.s32.totalorder %s18, %s21
    %p27 = scmp.eq.s32.totalorder %s8, 0
    %p28 = por %p26, %p27
    %p29 = scmp.ne.s32.totalorder %s18, %s21
    %p30 = scmp.eq.s32.totalorder %s13, 7
    %p31 = por %p29, %p30
    %p32 = scmp.ne.s32.totalorder %s21, %s22
    %p33 = scmp.eq.s32.totalorder %s13, 0
    %p34 = por %p32, %p33
    %p35 = scmp.ne.s32.totalorder %s21, %s22
    %p36 = scmp.eq.s32.totalorder %s14, 7
    %p37 = por %p35, %p36
    %p39 = scmp.ne.s32.totalorder %s22, %s38
    %p40 = scmp.eq.s32.totalorder %s14, 0
    %p41 = por %p39, %p40
    %s42 = ssub.s32 %s8, %s15
    %p43 = scmp.eq.s32.totalorder %s42, 0
    %s45 = sadd.s32 %s44, 1
    %s46 = scalar_select %p43, %s44, %s45
    %p49 = pneg %p43
    %p50 = scmp.eq.s32.totalorder %s8, 7
    %p51 = por %p49, %p50
    %p52 = scmp.ne.s32.totalorder %s44, %s47
    %p53 = scmp.eq.s32.totalorder %s8, 0
    %p54 = por %p52, %p53
    %p55 = scmp.ne.s32.totalorder %s44, %s47
    %p56 = scmp.eq.s32.totalorder %s13, 7
    %p57 = por %p55, %p56
    %p58 = scmp.ne.s32.totalorder %s47, %s48
    %p59 = scmp.eq.s32.totalorder %s13, 0
    %p60 = por %p58, %p59
    %p61 = scmp.ne.s32.totalorder %s47, %s48
    %p62 = scmp.eq.s32.totalorder %s14, 7
    %p63 = por %p61, %p62
    %p65 = scmp.ne.s32.totalorder %s48, %s64
    %p66 = scmp.eq.s32.totalorder %s14, 0
    %p67 = por %p65, %p66
    %s68 = ssub.s32 %s8, %s15
    %p69 = scmp.eq.s32.totalorder %s68, 0
    %s71 = sadd.s32 %s70, 1
    %s72 = scalar_select %p69, %s70, %s71
    %p75 = pneg %p69
    %p76 = scmp.eq.s32.totalorder %s8, 7
    %p77 = por %p75, %p76
    %p78 = scmp.ne.s32.totalorder %s70, %s73
    %p79 = scmp.eq.s32.totalorder %s8, 0
    %p80 = por %p78, %p79
    %p81 = scmp.ne.s32.totalorder %s70, %s73
    %p82 = scmp.eq.s32.totalorder %s13, 7
    %p83 = por %p81, %p82
    %p84 = scmp.ne.s32.totalorder %s73, %s74
    %p85 = scmp.eq.s32.totalorder %s13, 0
    %p86 = por %p84, %p85
    %p87 = scmp.ne.s32.totalorder %s73, %s74
    %p88 = scmp.eq.s32.totalorder %s14, 7
    %p89 = por %p87, %p88
    %p91 = scmp.ne.s32.totalorder %s74, %s90
    %p92 = scmp.eq.s32.totalorder %s14, 0
    %p93 = por %p91, %p92
    %p94 = scmp.le.s32.totalorder 1, %s8
    %p95 = scmp.lt.s32.totalorder %s8, 9
    %p96 = pnand %p94, %p95
    %p97 = pneg %p96
    // Predicated region
    $region9: #{tpu_custom_call.1} parent=5 // pred_check
      _
    $region10: #{tpu_custom_call.1} parent=5 // pred_check_branch
      %99 = sbr.rel (%p96) target = $region12
    $region11: #{tpu_custom_call.1} parent=5 // pred_region
      %s100 = ssub.s32 %s8, 1
    $region12: #{tpu_custom_call.1} parent=5 // pred_fallthru
      _
    %p101 = scmp.lt.s32.totalorder %s8, 8
    // Predicated region
    $region13: #{tpu_custom_call.1} parent=5 // pred_check
      %p102 = pneg %p101
    $region14: #{tpu_custom_call.1} parent=5 // pred_check_branch
      %104 = sbr.rel (%p102) target = $region16
    $region15: #{tpu_custom_call.1} parent=5 // pred_region
      // Predicated region
      $region17: #{tpu_custom_call.1} parent=15 // pred_check
        %p105 = pneg %p28
      $region18: #{tpu_custom_call.1} parent=15 // pred_check_branch
        %107 = sbr.rel (%p105) target = $region20
      $region19: #{tpu_custom_call.1} parent=15 // pred_region
        %s108 = smul.u32 2, %s8
        %p109 = scmp.lt.s32.totalorder %s108, 15
        %s110 = scalar_select %p109, %s108, 15
        %s111 = smul.addr %s110, 8
        %s112 = scalar_lea.vmem %s0, %s111
        %s113 = smul.u32 2, %s8
      $region20: #{tpu_custom_call.1} parent=15 // pred_fallthru
        _
      // Predicated region
      $region21: #{tpu_custom_call.1} parent=15 // pred_check
        %p114 = pneg %p54
      $region22: #{tpu_custom_call.1} parent=15 // pred_check_branch
        %116 = sbr.rel (%p114) target = $region24
      $region23: #{tpu_custom_call.1} parent=15 // pred_region
        %s117 = smul.u32 2, %s8
        %p118 = scmp.lt.s32.totalorder %s117, 15
        %s119 = scalar_select %p118, %s117, 15
        %s120 = smul.addr %s119, 8
        %s121 = scalar_lea.vmem %s1, %s120
        %s122 = smul.u32 2, %s8
      $region24: #{tpu_custom_call.1} parent=15 // pred_fallthru
        _
    $region16: #{tpu_custom_call.1} parent=5 // pred_fallthru
      _
    %p123 = scmp.le.s32.totalorder 1, %s8
    %p124 = scmp.lt.s32.totalorder %s8, 9
    %p125 = pnand %p123, %p124
    %p126 = pneg %p125
    // Predicated region
    $region25: #{tpu_custom_call.1} parent=5 // pred_check
      _
    $region26: #{tpu_custom_call.1} parent=5 // pred_check_branch
      %128 = sbr.rel (%p125) target = $region28
    $region27: #{tpu_custom_call.1} parent=5 // pred_region
      %s129 = ssub.s32 %s8, 1
      %s130 = smul.u32 2, %s13
      %p131 = scmp.lt.s32.totalorder %s130, 15
      %s132 = scalar_select %p131, %s130, 15
      %s133 = smul.addr %s132, 8
      %s134 = scalar_lea.vmem %s0, %s133
      %p135 = pneg %p34
      %p136 = pneg %p31
      %s137 = smul.u32 2, %s13
      %p138 = scmp.lt.s32.totalorder %s137, 15
      %s139 = scalar_select %p138, %s137, 15
      %s140 = smul.addr %s139, 8
      %s141 = scalar_lea.vmem %s1, %s140
      %p142 = pneg %p60
      %p143 = pneg %p57
      %p144 = pneg %p86
      %p145 = pneg %p83
      %s146 = smul.u32 2, %s13
      %p147 = scmp.lt.s32.totalorder %s146, 15
      %s148 = scalar_select %p147, %s146, 15
      %s149 = smul.addr %s148, 8
      %s150 = scalar_lea.vmem %s2, %s149
      %s151 = smul.u32 2, %s13
      %p152 = scmp.lt.s32.totalorder %s151, 15
      %s153 = scalar_select %p152, %s151, 15
      %s154 = smul.addr %s153, 8
      %s155 = scalar_lea.vmem %s0, %s154
      %s156 = smul.u32 2, %s13
      %s157 = smul.u32 2, %s13
      %p158 = scmp.lt.s32.totalorder %s157, 15
      %s159 = scalar_select %p158, %s157, 15
      %s160 = smul.addr %s159, 8
      %s161 = scalar_lea.vmem %s1, %s160
      %s162 = smul.u32 2, %s13
      %s163 = smul.u32 2, %s13
      %p164 = scmp.lt.s32.totalorder %s163, 15
      %s165 = scalar_select %p164, %s163, 15
      %s166 = smul.addr %s165, 8
      %s167 = scalar_lea.vmem %s2, %s166
      %s168 = smul.u32 2, %s13
      %v169 = vld [vmem:[%s155] sm:$0xff]
      %v170 = vld [vmem:[%s155 + $0x8] sm:$0xff]
      %vm171 = vcmask 130048
      %172 = vst.msk [vmem:[%s167] sm:$0xff] %vm171, %v169
      %173 = vst.msk [vmem:[%s167 + $0x8] sm:$0xff] %vm171, %v170
      %v174 = vld [vmem:[%s161] sm:$0xff]
      %v175 = vld [vmem:[%s161 + $0x8] sm:$0xff]
      %178 = vrot.lane.b32.xlu0 %v174, 16
      %v179 = vpop.permute.xlu0 %178
      %180 = vrot.lane.b32.xlu0 %v175, 16
      %v181 = vpop.permute.xlu0 %180
      %vm184 = vcmask 261248
      %185 = vst.msk [vmem:[%s167] sm:$0xff] %vm184, %v179
      %186 = vst.msk [vmem:[%s167 + $0x8] sm:$0xff] %vm184, %v181
      %s187 = smul.u32 2, %s13
      %p188 = scmp.lt.s32.totalorder %s187, 15
      %s189 = scalar_select %p188, %s187, 15
      %s190 = smul.addr %s189, 8
      %s191 = scalar_lea.vmem %s2, %s190
      // Predicated region
      $region29: #{tpu_custom_call.1} parent=27 // pred_check
        %p192 = pneg %p83
      $region30: #{tpu_custom_call.1} parent=27 // pred_check_branch
        %194 = sbr.rel (%p192) target = $region32
      $region31: #{tpu_custom_call.1} parent=27 // pred_region
        %s195 = smul.u32 2, %s13
      $region32: #{tpu_custom_call.1} parent=27 // pred_fallthru
        _
    $region28: #{tpu_custom_call.1} parent=5 // pred_fallthru
      _
    %p196 = scmp.le.s32.totalorder 2, %s8
    // Predicated region
    $region33: #{tpu_custom_call.1} parent=5 // pred_check
      %p197 = pneg %p196
    $region34: #{tpu_custom_call.1} parent=5 // pred_check_branch
      %199 = sbr.rel (%p197) target = $region36
    $region35: #{tpu_custom_call.1} parent=5 // pred_region
      %s200 = ssub.s32 %s8, 2
      // Predicated region
      $region37: #{tpu_custom_call.1} parent=35 // pred_check
        %p201 = pneg %p89
      $region38: #{tpu_custom_call.1} parent=35 // pred_check_branch
        %203 = sbr.rel (%p201) target = $region40
      $region39: #{tpu_custom_call.1} parent=35 // pred_region
        %s204 = smul.u32 2, %s14
        %p205 = scmp.lt.s32.totalorder %s204, 15
        %s206 = scalar_select %p205, %s204, 15
        %s207 = smul.addr %s206, 8
        %s208 = scalar_lea.vmem %s2, %s207
      $region40: #{tpu_custom_call.1} parent=35 // pred_fallthru
        _
    $region36: #{tpu_custom_call.1} parent=5 // pred_fallthru
      _
  $region6: #{tpu_custom_call.1} parent=0 // loop_footer
    %s12 = sadd.s32 1, %s8
  $region7: #{tpu_custom_call.1} parent=0 // loop_footer_branch
    %7 = sbr.rel target = $region3
  $region8: #{tpu_custom_call.1} parent=0 // loop_exit
    _

</llo_original>
